<compile_context>
chip_gen: v6e
topology: v6e:2x2x1
jax: 0.10.0
libtpu: 0.0.40
codegen_flags: <defaults>
</compile_context>

<pallas_src>
import math

import jax
import jax.numpy as jnp
from jax import lax
from jax.experimental import pallas as pl
from jax.experimental.pallas import tpu as pltpu

EPS = 1e-5  # PyTorch nn.LayerNorm default


def _prenorm_kernel(x_ref, gamma_ref, beta_ref, w_ref, b_ref, o_ref, y_ref):
    # Grid: (row_tiles, out_col_tiles); j (axis 1) iterates fastest.
    # x_ref:     (tm, D)   tile of flattened rows
    # gamma_ref: (1, D)    LayerNorm scale, f32
    # beta_ref:  (1, D)    LayerNorm shift, f32
    # w_ref:     (D, tn)   Linear weight slab (native dtype, e.g. bf16)
    # b_ref:     (1, tn)   Linear bias slab, f32
    # y_ref:     (tm, D)   VMEM scratch holding LayerNorm(x) in w's dtype

    @pl.when(pl.program_id(1) == 0)
    def _():
        # LayerNorm in f32; only two cross-lane (XLU) reductions per row tile:
        # sum(x) and sum(xc*xc).
        x = x_ref[...].astype(jnp.float32)
        mean = jnp.mean(x, axis=-1, keepdims=True)
        xc = x - mean
        var = jnp.mean(xc * xc, axis=-1, keepdims=True)
        inv = lax.rsqrt(var + EPS)                      # EUP
        y = xc * inv * gamma_ref[...] + beta_ref[...]   # gamma/beta already f32
        # Cast once into the MXU operand dtype (bf16 weights -> bf16 operands).
        y_ref[...] = y.astype(y_ref.dtype)

    # fn = Linear: MXU matmul with f32 accumulation, no f32 up-cast of W.
    out = jnp.dot(y_ref[...], w_ref[...], preferred_element_type=jnp.float32)
    out = out + b_ref[...]                              # bias already f32
    o_ref[...] = out.astype(o_ref.dtype)


def _round_up(v, m):
    return (v + m - 1) // m * m


def prenorm_linear(x, gamma, beta, w, b, *, row_tile=256, col_tile=256):
    """output = Linear(LayerNorm(x));  x: (..., D) -> (..., Dout)."""
    *lead, D = x.shape
    Dout = w.shape[1]
    rows = math.prod(lead) if lead else 1

    x2 = x.reshape(rows, D)

    # --- Row (M) tiling: large tile for MXU utilization; pad remainder. ---
    tm = min(row_tile, _round_up(rows, 8))
    rows_p = _round_up(rows, tm)
    if rows_p != rows:
        x2 = jnp.pad(x2, ((0, rows_p - rows), (0, 0)))

    # --- Output-column (N) tiling: full Dout if small, else 128-aligned slab.
    if Dout <= col_tile:
        tn = Dout
        dout_p = Dout
    else:
        tn = col_tile
        dout_p = _round_up(Dout, tn)
    w_p = w if dout_p == Dout else jnp.pad(w, ((0, 0), (0, dout_p - Dout)))
    b_p = b if dout_p == Dout else jnp.pad(b, ((0, dout_p - Dout),))

    # Cast the small params to f32 ONCE here (not per grid iteration).
    gamma2 = gamma.reshape(1, D).astype(jnp.float32)
    beta2 = beta.reshape(1, D).astype(jnp.float32)
    b2 = b_p.reshape(1, dout_p).astype(jnp.float32)

    grid = (rows_p // tm, dout_p // tn)

    out2 = pl.pallas_call(
        _prenorm_kernel,
        out_shape=jax.ShapeDtypeStruct((rows_p, dout_p), x.dtype),
        grid_spec=pltpu.PrefetchScalarGridSpec(
            num_scalar_prefetch=0,
            grid=grid,
            in_specs=[
                pl.BlockSpec((tm, D), lambda i, j: (i, 0)),   # x rows (re-DMA'd
                                                              # only when i moves)
                pl.BlockSpec((1, D), lambda i, j: (0, 0)),    # gamma (f32)
                pl.BlockSpec((1, D), lambda i, j: (0, 0)),    # beta  (f32)
                pl.BlockSpec((D, tn), lambda i, j: (0, j)),   # W slab
                pl.BlockSpec((1, tn), lambda i, j: (0, j)),   # bias slab (f32)
            ],
            out_specs=pl.BlockSpec((tm, tn), lambda i, j: (i, j)),
            scratch_shapes=[pltpu.VMEM((tm, D), w.dtype)],    # LayerNorm(x) cache
        ),
        compiler_params=pltpu.CompilerParams(
            # Row tiles are independent (megacore / dual-TC shardable); the
            # column axis carries the LayerNorm scratch -> "arbitrary".
            dimension_semantics=("parallel", "arbitrary"),
            vmem_limit_bytes=64 * 1024 * 1024,
        ),
    )(x2, gamma2, beta2, w_p, b2)

    out2 = out2[:rows, :Dout]
    return out2.reshape(*lead, Dout)


def _reference(x, gamma, beta, w, b):
    xf = x.astype(jnp.float32)
    mean = jnp.mean(xf, axis=-1, keepdims=True)
    var = jnp.mean((xf - mean) ** 2, axis=-1, keepdims=True)
    xn = (xf - mean) * lax.rsqrt(var + EPS)
    y = xn * gamma.astype(jnp.float32) + beta.astype(jnp.float32)
    out = y @ w.astype(jnp.float32) + b.astype(jnp.float32)
    return out


if __name__ == "__main__":
    key = jax.random.PRNGKey(0)
    kx, kw, kb, kx2 = jax.random.split(key, 4)

    # --- Test 1: f32, shapes matching the module (batch=2, seq=8, dim=32) ---
    B, S, D = 2, 8, 32
    x = jax.random.normal(kx, (B, S, D), dtype=jnp.float32)
    gamma = jnp.ones((D,), dtype=jnp.float32)     # nn.LayerNorm init
    beta = jnp.zeros((D,), dtype=jnp.float32)
    w = jax.random.normal(kw, (D, D), dtype=jnp.float32) * 0.02  # fn = Linear(D, D)
    b = jax.random.normal(kb, (D,), dtype=jnp.float32) * 0.02

    out = jax.block_until_ready(prenorm_linear(x, gamma, beta, w, b))
    ref = _reference(x, gamma, beta, w, b)
    assert out.shape == (B, S, D)
    assert jnp.allclose(out, ref.astype(out.dtype), atol=1e-4, rtol=1e-4), \
        "f32 mismatch vs reference"

    # --- Test 2: bf16 activations/weights + ragged row count (pads to tile) ---
    B2, S2 = 3, 5                                  # 15 rows -> padded internally
    x_bf = jax.random.normal(kx2, (B2, S2, D), dtype=jnp.float32).astype(jnp.bfloat16)
    w_bf = w.astype(jnp.bfloat16)
    b_bf = b.astype(jnp.bfloat16)
    out_bf = jax.block_until_ready(prenorm_linear(x_bf, gamma, beta, w_bf, b_bf))
    ref_bf = _reference(x_bf, gamma, beta, w_bf, b_bf)
    assert out_bf.shape == (B2, S2, D)
    assert jnp.allclose(out_bf.astype(jnp.float32), ref_bf, atol=2e-2, rtol=2e-2), \
        "bf16 mismatch vs reference"

    print("KERNEL_OK")
</pallas_src>

<mosaic_0001>
module attributes {stable_mosaic.version = 11 : i64} {
  func.func @_prenorm_kernel(%arg0: i32, %arg1: i32, %arg2: memref<16x32xf32, #tpu.memory_space<vmem>>, %arg3: memref<1x32xf32, #tpu.memory_space<vmem>>, %arg4: memref<1x32xf32, #tpu.memory_space<vmem>>, %arg5: memref<32x32xf32, #tpu.memory_space<vmem>>, %arg6: memref<1x32xf32, #tpu.memory_space<vmem>>, %arg7: memref<16x32xf32, #tpu.memory_space<vmem>>, %arg8: memref<16x32xf32, #tpu.memory_space<vmem>>) attributes {dimension_semantics = [#tpu.dimension_semantics<parallel>, #tpu.dimension_semantics<arbitrary>], iteration_bounds = array<i64: 1, 1>, scalar_prefetch = 0 : i64, scratch_operands = 1 : i64, tpu.core_type = #tpu.core_type<tc>, window_params = [{transform_indices = @transform_0, window_bounds = array<i64: 16, 32>}, {pipeline_mode = #tpu.pipeline_mode<synchronous>, transform_indices = @transform_1, window_bounds = array<i64: 1, 32>}, {pipeline_mode = #tpu.pipeline_mode<synchronous>, transform_indices = @transform_2, window_bounds = array<i64: 1, 32>}, {transform_indices = @transform_3, window_bounds = array<i64: 32, 32>}, {transform_indices = @transform_4, window_bounds = array<i64: 1, 32>}, {transform_indices = @transform_5, window_bounds = array<i64: 16, 32>}]} {
    %c0_i32 = arith.constant 0 : i32
    %0 = arith.cmpi eq, %arg1, %c0_i32 : i32
    %1 = arith.extui %0 : i1 to i32
    %c0_i32_0 = arith.constant 0 : i32
    %2 = arith.cmpi ne, %1, %c0_i32_0 : i32
    scf.if %2 {
      %c0_8 = arith.constant 0 : index
      %c0_9 = arith.constant 0 : index
      %10 = vector.load %arg2[%c0_8, %c0_9] : memref<16x32xf32, #tpu.memory_space<vmem>>, vector<16x32xf32>
      %cst_10 = arith.constant dense<0.000000e+00> : vector<16xf32>
      %11 = vector.multi_reduction <add>, %10, %cst_10 [1] : vector<16x32xf32> to vector<16xf32>
      %12 = vector.shape_cast %11 : vector<16xf32> to vector<16x1xf32>
      %cst_11 = arith.constant 3.200000e+01 : f32
      %13 = vector.broadcast %cst_11 : f32 to vector<16x1xf32>
      %14 = arith.divf %12, %13 : vector<16x1xf32>
      %15 = vector.broadcast %14 : vector<16x1xf32> to vector<16x32xf32>
      %16 = arith.subf %10, %15 : vector<16x32xf32>
      %17 = arith.mulf %16, %16 : vector<16x32xf32>
      %cst_12 = arith.constant dense<0.000000e+00> : vector<16xf32>
      %18 = vector.multi_reduction <add>, %17, %cst_12 [1] : vector<16x32xf32> to vector<16xf32>
      %19 = vector.shape_cast %18 : vector<16xf32> to vector<16x1xf32>
      %cst_13 = arith.constant 3.200000e+01 : f32
      %20 = vector.broadcast %cst_13 : f32 to vector<16x1xf32>
      %21 = arith.divf %19, %20 : vector<16x1xf32>
      %cst_14 = arith.constant 9.99999974E-6 : f32
      %22 = vector.broadcast %cst_14 : f32 to vector<16x1xf32>
      %23 = arith.addf %21, %22 : vector<16x1xf32>
      %24 = math.rsqrt %23 : vector<16x1xf32>
      %25 = vector.broadcast %24 : vector<16x1xf32> to vector<16x32xf32>
      %26 = arith.mulf %16, %25 : vector<16x32xf32>
      %c0_15 = arith.constant 0 : index
      %c0_16 = arith.constant 0 : index
      %27 = vector.load %arg3[%c0_15, %c0_16] : memref<1x32xf32, #tpu.memory_space<vmem>>, vector<1x32xf32>
      %28 = vector.broadcast %27 : vector<1x32xf32> to vector<16x32xf32>
      %29 = arith.mulf %26, %28 : vector<16x32xf32>
      %c0_17 = arith.constant 0 : index
      %c0_18 = arith.constant 0 : index
      %30 = vector.load %arg4[%c0_17, %c0_18] : memref<1x32xf32, #tpu.memory_space<vmem>>, vector<1x32xf32>
      %31 = vector.broadcast %30 : vector<1x32xf32> to vector<16x32xf32>
      %32 = arith.addf %29, %31 : vector<16x32xf32>
      %c0_19 = arith.constant 0 : index
      %c0_20 = arith.constant 0 : index
      %33 = vector.load %arg8[%c0_19, %c0_20] : memref<16x32xf32, #tpu.memory_space<vmem>>, vector<16x32xf32>
      tpu.vector_store %arg8[%c0_19, %c0_20], %32 {strides = array<i32>} : memref<16x32xf32, #tpu.memory_space<vmem>>, vector<16x32xf32>,
    } else {
    }
    %c0 = arith.constant 0 : index
    %c0_1 = arith.constant 0 : index
    %3 = vector.load %arg8[%c0, %c0_1] : memref<16x32xf32, #tpu.memory_space<vmem>>, vector<16x32xf32>
    %c0_2 = arith.constant 0 : index
    %c0_3 = arith.constant 0 : index
    %4 = vector.load %arg5[%c0_2, %c0_3] : memref<32x32xf32, #tpu.memory_space<vmem>>, vector<32x32xf32>
    %cst = arith.constant dense<0.000000e+00> : vector<16x32xf32>
    %5 = tpu.matmul %3, %4, %cst {dimension_numbers = #tpu.dot_dimension_numbers<[1], [0], [0], [1], [0, 0, 1, 1], [], []>} : vector<16x32xf32>, vector<32x32xf32>, vector<16x32xf32> -> vector<16x32xf32>
    %c0_4 = arith.constant 0 : index
    %c0_5 = arith.constant 0 : index
    %6 = vector.load %arg6[%c0_4, %c0_5] : memref<1x32xf32, #tpu.memory_space<vmem>>, vector<1x32xf32>
    %7 = vector.broadcast %6 : vector<1x32xf32> to vector<16x32xf32>
    %8 = arith.addf %5, %7 : vector<16x32xf32>
    %c0_6 = arith.constant 0 : index
    %c0_7 = arith.constant 0 : index
    %9 = vector.load %arg7[%c0_6, %c0_7] : memref<16x32xf32, #tpu.memory_space<vmem>>, vector<16x32xf32>
    tpu.vector_store %arg7[%c0_6, %c0_7], %8 {strides = array<i32>} : memref<16x32xf32, #tpu.memory_space<vmem>>, vector<16x32xf32>,
    return
  }
  func.func @transform_0(%arg0: i32, %arg1: i32) -> (i32, i32) {
    %c0_i32 = arith.constant 0 : i32
    %c0_i32_0 = arith.constant 0 : i32
    return %arg0, %c0_i32 : i32, i32
  }
  func.func @transform_1(%arg0: i32, %arg1: i32) -> (i32, i32) {
    %c0_i32 = arith.constant 0 : i32
    %c0_i32_0 = arith.constant 0 : i32
    %c0_i32_1 = arith.constant 0 : i32
    return %c0_i32, %c0_i32_0 : i32, i32
  }
  func.func @transform_2(%arg0: i32, %arg1: i32) -> (i32, i32) {
    %c0_i32 = arith.constant 0 : i32
    %c0_i32_0 = arith.constant 0 : i32
    %c0_i32_1 = arith.constant 0 : i32
    return %c0_i32, %c0_i32_0 : i32, i32
  }
  func.func @transform_3(%arg0: i32, %arg1: i32) -> (i32, i32) {
    %c0_i32 = arith.constant 0 : i32
    %c0_i32_0 = arith.constant 0 : i32
    return %c0_i32, %arg1 : i32, i32
  }
  func.func @transform_4(%arg0: i32, %arg1: i32) -> (i32, i32) {
    %c0_i32 = arith.constant 0 : i32
    %c0_i32_0 = arith.constant 0 : i32
    return %c0_i32, %arg1 : i32, i32
  }
  func.func @transform_5(%arg0: i32, %arg1: i32) -> (i32, i32) {
    %c0_i32 = arith.constant 0 : i32
    return %arg0, %arg1 : i32, i32
  }
}

</mosaic_0001>

<llo_original>
// kernel: tpu_custom_call.1
$region0: #{tpu_custom_call.1}
  #allocation0 [shape = 'u32[]', space=smem, size = 0x4, offset = 0x4, fixed_abs, tag = 'smem constant byte address 0x4 - core index']
  #allocation1 [shape = 'u32[144,128]{1,0:T(1,128)}', space=vmem, size = 0x12000, scoped, tag = 'internal scratch']
  #allocation2 [shape = 'f32[16,32]{1,0:T(8,128)}', space=vmem, size = 0x2000, scoped, tag = 'scratch operand']
  %s0 = inlined_call_operand.hbm [shape: f32[16,32], index: 0, kind: input, shape index: {}]
  %s1 = inlined_call_operand.vmem [shape: f32[1,32], index: 1, kind: input, shape index: {}]
  %s2 = inlined_call_operand.vmem [shape: f32[1,32], index: 2, kind: input, shape index: {}]
  %s3 = inlined_call_operand.hbm [shape: f32[32,32], index: 3, kind: input, shape index: {}]
  %s4 = inlined_call_operand.vmem [shape: f32[1,32], index: 4, kind: input, shape index: {}]
  %s5 = inlined_call_operand.hbm [shape: f32[16,32], index: 5, kind: output, shape index: {}]
  %s6 = sld [smem:[#allocation0]]
  $region42: #{tpu_custom_call.1} parent=0
    _
  %s8 = ssub.s32 1, %s6
  %s9 = scalar_select 0, %s8, %s6
  $region1: #{tpu_custom_call.1} parent=0
    #allocation3 [shape = 'u8[8192]{0}', space=vmem, size = 0x2000, scoped, tag = 'input window, operand 0, single buffered']
    #allocation4 [shape = 's32[1]{0}', space=sflag, size = 0x4, scoped, tag = 'scoped memory for tpu_custom_call.1']
    #allocation5 [shape = 's32[1]{0}', space=sflag, size = 0x4, scoped, tag = 'scoped memory for tpu_custom_call.1']
    #allocation6 [shape = 'u8[16384]{0}', space=vmem, size = 0x4000, scoped, tag = 'input window, operand 3, single buffered']
    #allocation7 [shape = 's32[1]{0}', space=sflag, size = 0x4, scoped, tag = 'scoped memory for tpu_custom_call.1']
    #allocation8 [shape = 'u8[8192]{0}', space=vmem, size = 0x2000, scoped, tag = 'output window, operand 0, single buffered']
    %10 = vsyncpa [#allocation4], 0
    %11 = vsyncpa [#allocation7], 0
    %12 = vsyncpa [#allocation5], 0
    // Predicated region
    $region2: #{tpu_custom_call.1} parent=1 // pred_check
      _
    $region3: #{tpu_custom_call.1} parent=1 // pred_check_branch
      %14 = sbr.rel (0) target = $region5
    $region4: #{tpu_custom_call.1} parent=1 // pred_region
      %s16 = ssub.s32 256, 256
      %17 = vsyncadd [#allocation4], %s16
      %s18 = sshll.u32 [#allocation3], 4
      %s19 = int_to_ptr.vmem [resolvable:$true] %s18
      %24 = dma.hbm_to_vmem [thread:$0]  %s0, 256, %s19, [#allocation4], 128, 128, 8
    $region5: #{tpu_custom_call.1} parent=1 // pred_fallthru
      _
    // Predicated region
    $region6: #{tpu_custom_call.1} parent=1 // pred_check
      _
    $region7: #{tpu_custom_call.1} parent=1 // pred_check_branch
      %26 = sbr.rel (0) target = $region9
    $region8: #{tpu_custom_call.1} parent=1 // pred_region
      _
    $region9: #{tpu_custom_call.1} parent=1 // pred_fallthru
      _
    // Predicated region
    $region10: #{tpu_custom_call.1} parent=1 // pred_check
      _
    $region11: #{tpu_custom_call.1} parent=1 // pred_check_branch
      %28 = sbr.rel (0) target = $region13
    $region12: #{tpu_custom_call.1} parent=1 // pred_region
      _
    $region13: #{tpu_custom_call.1} parent=1 // pred_fallthru
      _
    // Predicated region
    $region14: #{tpu_custom_call.1} parent=1 // pred_check
      _
    $region15: #{tpu_custom_call.1} parent=1 // pred_check_branch
      %30 = sbr.rel (0) target = $region17
    $region16: #{tpu_custom_call.1} parent=1 // pred_region
      %s32 = ssub.s32 512, 512
      %33 = vsyncadd [#allocation7], %s32
      %s34 = sshll.u32 [#allocation6], 4
      %s35 = int_to_ptr.vmem [resolvable:$true] %s34
      %40 = dma.hbm_to_vmem [thread:$0]  %s3, 512, %s35, [#allocation7], 128, 128, 8
    $region17: #{tpu_custom_call.1} parent=1 // pred_fallthru
      _
    // Predicated region
    $region18: #{tpu_custom_call.1} parent=1 // pred_check
      _
    $region19: #{tpu_custom_call.1} parent=1 // pred_check_branch
      %42 = sbr.rel (0) target = $region21
    $region20: #{tpu_custom_call.1} parent=1 // pred_region
      _
    $region21: #{tpu_custom_call.1} parent=1 // pred_fallthru
      _
    // Predicated region
    $region22: #{tpu_custom_call.1} parent=1 // pred_check
      _
    $region23: #{tpu_custom_call.1} parent=1 // pred_check_branch
      %44 = sbr.rel (0) target = $region25
    $region24: #{tpu_custom_call.1} parent=1 // pred_region
      %45 = dma.done [#allocation4], 256
    $region25: #{tpu_custom_call.1} parent=1 // pred_fallthru
      _
    // Predicated region
    $region26: #{tpu_custom_call.1} parent=1 // pred_check
      _
    $region27: #{tpu_custom_call.1} parent=1 // pred_check_branch
      %47 = sbr.rel (0) target = $region29
    $region28: #{tpu_custom_call.1} parent=1 // pred_region
      %48 = dma.done [#allocation7], 512
    $region29: #{tpu_custom_call.1} parent=1 // pred_fallthru
      _
    %p49 = scmp.eq.s32.totalorder 0, 0
    // Predicated region
    $region30: #{tpu_custom_call.1} parent=1 // pred_check
      %p50 = pneg %p49
    $region31: #{tpu_custom_call.1} parent=1 // pred_check_branch
      %52 = sbr.rel (%p50) target = $region33
    $region32: #{tpu_custom_call.1} parent=1 // pred_region
      %v53 = vld [vmem:[#allocation3] sm:$0xff]
      %v54 = vld [vmem:[#allocation3 + $0x8] sm:$0xff]
      %vm55 = vcmask 261120
      %v56 = vsel %vm55, %v53, 0.0
      %57 = vadd.xlane.f32.xlu0 %v56
      %v58 = vpop.xlane.xlu0 %57
      %v59 = vsel %vm55, %v54, 0.0
      %60 = vadd.xlane.f32.xlu0 %v59
      %v61 = vpop.xlane.xlu0 %60
      %v62 = vrcp.pop 32.0
      %v63 = vmul.f32 %v58, %v62
      %v64 = vmul.f32 %v61, %v62
      %v65 = vsub.f32 %v53, %v63
      %v66 = vsub.f32 %v54, %v64
      %v67 = vmul.f32 %v65, %v65
      %v68 = vmul.f32 %v66, %v66
      %v69 = vsel %vm55, %v67, 0.0
      %70 = vadd.xlane.f32.xlu0 %v69
      %v71 = vpop.xlane.xlu0 %70
      %v72 = vsel %vm55, %v68, 0.0
      %73 = vadd.xlane.f32.xlu0 %v72
      %v74 = vpop.xlane.xlu0 %73
      %v75 = vmul.f32 %v71, %v62
      %v76 = vmul.f32 %v74, %v62
      %v77 = vadd.f32 %v75, 1e-05
      %v78 = vadd.f32 %v76, 1e-05
      %v79 = vrsqrt.pop %v77
      %v80 = vrsqrt.pop %v78
      %v81 = vmul.f32 %v65, %v79
      %v82 = vmul.f32 %v66, %v80
      %v83 = vld [vmem:[%s1] sm:$0x1]
      %v85 = vlaneseq
      %v86 = vshrl.u32 %v85, 7
      %v87 = vsub.s32 0, %v86
      %v88 = vrot.slane %v83, %v87
      %v90 = vmul.f32 %v81, %v88
      %v91 = vmul.f32 %v82, %v88
      %v92 = vld [vmem:[%s2] sm:$0x1]
      %v94 = vlaneseq
      %v95 = vshrl.u32 %v94, 7
      %v96 = vsub.s32 0, %v95
      %v97 = vrot.slane %v92, %v96
      %v99 = vadd.f32 %v90, %v97
      %v100 = vadd.f32 %v91, %v97
      %101 = vst.msk [vmem:[#allocation2] sm:$0xff] %vm55, %v99
      %102 = vst.msk [vmem:[#allocation2 + $0x8] sm:$0xff] %vm55, %v100
    $region33: #{tpu_custom_call.1} parent=1 // pred_fallthru
      _
    %v103 = vld [vmem:[#allocation2] sm:$0xff]
    %v104 = vld [vmem:[#allocation2 + $0x8] sm:$0xff]
    %v105 = vld [vmem:[#allocation6] sm:$0xff]
    %v106 = vld [vmem:[#allocation6 + $0x8] sm:$0xff]
    %v107 = vld [vmem:[#allocation6 + $0x10] sm:$0xff]
    %v108 = vld [vmem:[#allocation6 + $0x18] sm:$0xff]
    %v109 = vld [vmem:[%s4] sm:$0x1]
    %v111 = vlaneseq
    %v112 = vshrl.u32 %v111, 7
    %v113 = vsub.s32 0, %v112
    %v114 = vrot.slane %v109, %v113
    %vm116 = vcmask 261120
    %v118 = vsel %vm116, %v103, 0
    %v121 = vsel %vm116, %v104, 0
    %123 = vmatprep.subr.mxu0 0.0
    %124 = vmatpush1.msra.mxu0 0.0
    %125 = vmatprep.subr.mxu0 0.0
    %126 = vmatpush1.msra.mxu0 0.0
    %127 = vmatprep.subr.mxu0 0.0
    %128 = vmatpush1.msra.mxu0 0.0
    %129 = vmatprep.subr.mxu0 0.0
    %130 = vmatpush1.msra.mxu0 0.0
    %131 = vmatprep.subr.mxu0 0.0
    %132 = vmatpush1.msra.mxu0 0.0
    %133 = vmatprep.subr.mxu0 0.0
    %134 = vmatpush1.msra.mxu0 0.0
    %135 = vmatprep.subr.mxu0 0.0
    %136 = vmatpush1.msra.mxu0 0.0
    %137 = vmatprep.subr.mxu0 0.0
    %138 = vmatpush1.msra.mxu0 0.0
    %139 = vmatprep.subr.mxu0 0.0
    %140 = vmatpush1.msra.mxu0 0.0
    %141 = vmatprep.subr.mxu0 0.0
    %142 = vmatpush1.msra.mxu0 0.0
    %143 = vmatprep.subr.mxu0 0.0
    %144 = vmatpush1.msra.mxu0 0.0
    %145 = vmatprep.subr.mxu0 0.0
    %146 = vmatpush1.msra.mxu0 0.0
    %147 = vmatprep.subr.mxu0 0.0
    %148 = vmatpush1.msra.mxu0 %v108
    %149 = vmatprep.subr.mxu0 0.0
    %150 = vmatpush1.msra.mxu0 %v107
    %151 = vmatprep.subr.mxu0 0.0
    %152 = vmatpush1.msra.mxu0 %v106
    %153 = vmatprep.subr.mxu0 0.0
    %154 = vmatpush1.msra.mxu0 %v105
    %155 = vmatprep.subr.mxu0 0.0
    %156 = vmatpush2.msra.mxu0 0.0
    %157 = vmatprep.subr.mxu0 0.0
    %158 = vmatpush2.msra.mxu0 0.0
    %159 = vmatprep.subr.mxu0 0.0
    %160 = vmatpush2.msra.mxu0 0.0
    %161 = vmatprep.subr.mxu0 0.0
    %162 = vmatpush2.msra.mxu0 0.0
    %163 = vmatprep.subr.mxu0 0.0
    %164 = vmatpush2.msra.mxu0 0.0
    %165 = vmatprep.subr.mxu0 0.0
    %166 = vmatpush2.msra.mxu0 0.0
    %167 = vmatprep.subr.mxu0 0.0
    %168 = vmatpush2.msra.mxu0 0.0
    %169 = vmatprep.subr.mxu0 0.0
    %170 = vmatpush2.msra.mxu0 0.0
    %171 = vmatprep.subr.mxu0 0.0
    %172 = vmatpush2.msra.mxu0 0.0
    %173 = vmatprep.subr.mxu0 0.0
    %174 = vmatpush2.msra.mxu0 0.0
    %175 = vmatprep.subr.mxu0 0.0
    %176 = vmatpush2.msra.mxu0 0.0
    %177 = vmatprep.subr.mxu0 0.0
    %178 = vmatpush2.msra.mxu0 0.0
    %179 = vmatprep.subr.mxu0 0.0
    %180 = vmatpush2.msra.mxu0 0.0
    %181 = vmatprep.subr.mxu0 0.0
    %182 = vmatpush2.msra.mxu0 0.0
    %183 = vmatprep.subr.mxu0 0.0
    %184 = vmatpush2.msra.mxu0 0.0
    %185 = vmatprep.subr.mxu0 0.0
    %186 = vmatpush2.msra.mxu0 0.0
    %187 = vmatprep.mubr.f32.mxu0 0.0
    %188 = vmatmul.mubr.f32.gmra.mxu0 %v118
    %v189 = vpop.f32.mrf.mxu0
    %v190 = vadd.f32 %v114, %v189
    %v191 = vpop.f32.mrf.mxu0
    %192 = vmatprep.mubr.f32.mxu0 0.0
    %193 = vmatmul.mubr.f32.gmra.mxu0 %v121
    %v194 = vpop.f32.mrf.mxu0
    %v195 = vadd.f32 %v114, %v194
    %v196 = vpop.f32.mrf.mxu0
    %197 = vdwg.mxu0
    %198 = vst.msk [vmem:[#allocation8] sm:$0xff] %vm116, %v190
    %199 = vst.msk [vmem:[#allocation8 + $0x8] sm:$0xff] %vm116, %v195
    // Predicated region
    $region34: #{tpu_custom_call.1} parent=1 // pred_check
      _
    $region35: #{tpu_custom_call.1} parent=1 // pred_check_branch
      %201 = sbr.rel (0) target = $region37
    $region36: #{tpu_custom_call.1} parent=1 // pred_region
      %s203 = ssub.s32 256, 256
      %204 = vsyncadd [#allocation5], %s203
      %s205 = sshll.u32 [#allocation8], 4
      %s206 = int_to_ptr.vmem [resolvable:$true] %s205
      %211 = dma.vmem_to_hbm [thread:$0]  %s206, 256, %s5, [#allocation5], 128, 128, 8
    $region37: #{tpu_custom_call.1} parent=1 // pred_fallthru
      _
    // Predicated region
    $region38: #{tpu_custom_call.1} parent=1 // pred_check
      _
    $region39: #{tpu_custom_call.1} parent=1 // pred_check_branch
      %213 = sbr.rel (0) target = $region41
    $region40: #{tpu_custom_call.1} parent=1 // pred_region
      %214 = dma.done [#allocation5], 256
    $region41: #{tpu_custom_call.1} parent=1 // pred_fallthru
      _
    %215 = vsyncpa [#allocation4], 1
    %216 = vsyncpa [#allocation7], 1
    %217 = vsyncpa [#allocation5], 1

</llo_original>
